<compile_context>
chip_gen: v5e
topology: v5e:2x2
jax: 0.10.0
libtpu: 0.0.40
codegen_flags: <defaults>
</compile_context>

<pallas_src>
import jax
import jax.numpy as jnp
from jax.experimental import pallas as pl
from jax.experimental.pallas import tpu as pltpu

# ----- model hyper-parameters (mirrors MultiObserverGNN.__init__) -----
FEATURE_DIM = 16
HIDDEN_DIM = 32
OUTPUT_DIM = 8
NUM_OBSERVERS = 4
VELOCITY_MAX = 0.9
VELOCITY_FACTOR = 0.5     # RelativisticGraphConv.velocity_factor init value
BN_EPS = 1e-5
LN_EPS = 1e-5

OH = NUM_OBSERVERS * HIDDEN_DIM      # 128 — lane-dense fused observer width
H2 = 2 * HIDDEN_DIM                  # 64
OUT_PAD = 128                        # lane-dense padded output / tail width

# ----- problem sizes -----
N_NODES = 32
N_EDGES = 64
TWO_E = 2 * N_EDGES                  # 128 — stacked (src|dst) gather rows


def multi_observer_kernel(
    eidx_ref,   # (8, 2E) int32  row0 = [src | dst] stacked, row1 = dst (first E lanes)
    wbuf_ref,   # (304, 128) f32 packed weights: [w_ft | w_cv_tiled | w1 | w2] (zero-padded)
    rbuf_ref,   # (9, 128)  f32  b_ft,b_cv,bn_scale,bn_shift,b1,ln_g,ln_b,b2,vels_wide
    x_ref,      # (N, F) f32
    out_ref,    # (N, 128) f32   (only first OUTPUT_DIM lanes meaningful)
):
    f32, bf16 = jnp.float32, jnp.bfloat16
    N = x_ref.shape[0]
    F, H = FEATURE_DIM, HIDDEN_DIM
    E = eidx_ref.shape[1] // 2

    # ---- unpack packed parameter slabs (static, sublane-aligned slices) ----
    w_ft = wbuf_ref[0:F, 0:H]                                    # [F, H]    f32
    w_cv = wbuf_ref[F:F + H, :].astype(bf16)                     # [H, OH]   bf16
    w1 = wbuf_ref[F + H:F + H + OH, :].astype(bf16)              # [OH, 128] bf16 (lanes>=64 zero)
    w2 = wbuf_ref[F + H + OH:F + H + OH + OUT_PAD, :]            # [128,128] f32 (rows>=64 zero)

    b_ft = rbuf_ref[0:1, 0:H]                                    # [1, H]
    b_cv = rbuf_ref[1:2, :]                                      # [1, OH]
    bn_scale = rbuf_ref[2:3, :]                                  # [1, OH] bn_gamma * softmax(att)
    bn_shift = rbuf_ref[3:4, :]                                  # [1, OH] bn_beta  * softmax(att)
    b1 = rbuf_ref[4:5, :]                                        # [1, 128] (lanes>=64 zero)
    ln_g = rbuf_ref[5:6, :]                                      # [1, 128] (lanes>=64 zero)
    ln_b = rbuf_ref[6:7, :]                                      # [1, 128] (lanes>=64 zero)
    b2 = rbuf_ref[7:8, :]                                        # [1, 128] (lanes>=8 zero)
    vels_w = rbuf_ref[8:9, :]                                    # [1, OH] per-observer vmax x H

    # ---- h = relu(feature_transform(x)) ; kept f32 (feeds the geometry path) ----
    h = jnp.maximum(
        jnp.dot(x_ref[...], w_ft, preferred_element_type=f32) + b_ft, 0.0)    # [N, H]

    # ---- one-hots built in-kernel from the single int32 slab ----
    stacked_row = eidx_ref[0:1, :]                               # [1, 2E]  src | dst
    dst_row = eidx_ref[1:2, 0:E]                                 # [1, E]
    gat_ohT = (jax.lax.broadcasted_iota(jnp.int32, (N, 2 * E), 0)
               == stacked_row).astype(f32)                       # [N, 2E]
    dst_ohT = (jax.lax.broadcasted_iota(jnp.int32, (N, E), 0)
               == dst_row).astype(bf16)                          # [N, E]  (exact in bf16)
    gat_oh = gat_ohT.T                                           # [2E, N] one small transpose

    # ---- fused gather: ONE [2E,N]@[N,H] matmul -> x_j rows + both endpoint positions ----
    g = jnp.dot(gat_oh, h, preferred_element_type=f32)           # [2E, H]
    x_j = g[0:E, :]                                              # [E, H]   h[src]
    delta = g[0:E, 0:3] - g[E:2 * E, 0:3]                        # [E, 3]   pos_j - pos_i
    dist = jnp.sqrt(jnp.sum(delta * delta, axis=1, keepdims=True))           # [E, 1]
    dmax = jnp.maximum(jnp.max(dist, axis=0, keepdims=True), 1e-8)           # [1, 1] (guarded)
    ratio = dist * pl.reciprocal(dmax, approx=True)                          # [E, 1]
    dir_sum = (jnp.sum(delta, axis=1, keepdims=True)
               * pl.reciprocal(dist + 1e-8, approx=True))                    # [E, 1]

    # ---- all observers fused, lane-dense [E, O*H=128] ----
    v_rel = VELOCITY_FACTOR * jnp.minimum(jnp.maximum(ratio, 0.0), vels_w)   # [E, OH]
    # aberration = 1/(gamma*(1+v*dirsum)) with 1/gamma = sqrt(1-v^2+eps): exact divide
    aberr = jnp.sqrt(1.0 - v_rel * v_rel + 1e-8) / (1.0 + v_rel * dir_sum)   # [E, OH]
    transformed = jnp.dot(x_j.astype(bf16), w_cv,
                          preferred_element_type=f32) + b_cv                 # [E, OH]
    msgs = transformed * aberr                                               # [E, OH]

    # ---- scatter-add over destination nodes: one 128-lane-dense matmul ----
    agg = jnp.dot(dst_ohT, msgs.astype(bf16), preferred_element_type=f32)    # [N, OH]

    # ---- per-observer BatchNorm (batch stats via MXU) + folded softmax(att) + ReLU ----
    mean_mat = jnp.full((N, N), 1.0 / N, dtype=f32)              # column-mean, pre-broadcast
    mean = jnp.dot(mean_mat, agg, preferred_element_type=f32)                # [N, OH]
    cen = agg - mean
    var = jnp.dot(mean_mat, cen * cen, preferred_element_type=f32)           # [N, OH]
    combined = jnp.maximum(
        cen * jax.lax.rsqrt(var + BN_EPS) * bn_scale + bn_shift, 0.0)        # [N, OH]

    # ---- integration MLP: Linear -> LayerNorm -> ReLU -> (Dropout=id) -> Linear ----
    # lane-dense [N,128] throughout; z lanes >= H2 are exactly zero (zero-padded w1/b1)
    z = jnp.dot(combined.astype(bf16), w1, preferred_element_type=f32) + b1  # [N, 128]
    ln_mat = jnp.full((OUT_PAD, OUT_PAD), 1.0 / H2, dtype=f32)   # row-mean over real 64 lanes
    mu = jnp.dot(z, ln_mat, preferred_element_type=f32)                      # [N, 128] bcast
    msq = jnp.dot(z * z, ln_mat, preferred_element_type=f32)                 # E[z^2]  bcast
    zn = jnp.maximum(
        (z - mu) * jax.lax.rsqrt(msq - mu * mu + LN_EPS) * ln_g + ln_b, 0.0)
    # TODO(synk): nn.Dropout(p=0.1) treated as identity (inference semantics).
    out_ref[...] = (jnp.dot(zn, w2, preferred_element_type=f32) + b2).astype(out_ref.dtype)


def init_params(key):
    ks = jax.random.split(key, 6)
    f, h, o, nobs = FEATURE_DIM, HIDDEN_DIM, OUTPUT_DIM, NUM_OBSERVERS

    def xavier(key, fan_in, fan_out):
        lim = (6.0 / (fan_in + fan_out)) ** 0.5
        return jax.random.uniform(key, (fan_in, fan_out), jnp.float32, -lim, lim)

    params = dict(
        w_ft=xavier(ks[0], f, h),
        b_ft=jnp.zeros((1, h), jnp.float32),
        w_cv=xavier(ks[1], h, h),
        b_cv=jnp.zeros((1, h), jnp.float32),
        vels=jnp.linspace(VELOCITY_MAX / nobs, VELOCITY_MAX, nobs, dtype=jnp.float32),
        bn_g=jnp.ones((nobs, h), jnp.float32),
        bn_b=jnp.zeros((nobs, h), jnp.float32),
        att=jnp.ones((nobs, h), jnp.float32) / nobs,
        w1=xavier(ks[2], nobs * h, 2 * h),
        b1=jax.random.uniform(ks[3], (1, 2 * h), jnp.float32, -0.05, 0.05),
        ln_g=jnp.ones((1, 2 * h), jnp.float32),
        ln_b=jnp.zeros((1, 2 * h), jnp.float32),
        w2=xavier(ks[4], 2 * h, o),
        b2=jax.random.uniform(ks[5], (1, o), jnp.float32, -0.05, 0.05),
    )
    return params


def _pad_to(a, rows, cols):
    return jnp.pad(a, ((0, rows - a.shape[0]), (0, cols - a.shape[1])))


def pack_params(p):
    """Host-side, once: fold softmax(attention) into the BN affine, tile the shared
    conv weight across observers, zero-pad everything lane-dense, pack 2 slabs."""
    f, h = FEATURE_DIM, HIDDEN_DIM
    att_sm = jax.nn.softmax(p["att"], axis=1)                 # [O, H], > 0
    bn_scale = (p["bn_g"] * att_sm).reshape(1, OH)            # relu(v)*s == relu(v*s), s>0
    bn_shift = (p["bn_b"] * att_sm).reshape(1, OH)
    w_cv_tiled = jnp.tile(p["w_cv"], (1, NUM_OBSERVERS))      # [H, OH]
    b_cv_tiled = jnp.tile(p["b_cv"], (1, NUM_OBSERVERS))      # [1, OH]
    vels_wide = jnp.repeat(p["vels"], h).reshape(1, OH)       # [1, OH]

    wbuf = jnp.concatenate([
        _pad_to(p["w_ft"], f, OUT_PAD),          # rows   0: 16
        _pad_to(w_cv_tiled, h, OUT_PAD),         # rows  16: 48
        _pad_to(p["w1"], OH, OUT_PAD),           # rows  48:176  (lanes >= 64 zero)
        _pad_to(p["w2"], OUT_PAD, OUT_PAD),      # rows 176:304  (rows >= 64, lanes >= 8 zero)
    ], axis=0).astype(jnp.float32)               # [304, 128]

    rows = [p["b_ft"], b_cv_tiled, bn_scale, bn_shift,
            p["b1"], p["ln_g"], p["ln_b"], p["b2"], vels_wide]
    rbuf = jnp.concatenate([_pad_to(r, 1, OUT_PAD) for r in rows],
                           axis=0).astype(jnp.float32)        # [9, 128]
    return {"wbuf": wbuf, "rbuf": rbuf}


@jax.jit
def multi_observer_gnn(x, edge_index, packed):
    n, e = x.shape[0], edge_index.shape[1]
    assert 2 * e == TWO_E, "stacked-gather layout assumes 2*E == 128"

    # single compact (8, 2E) int32 edge slab: row0 = src|dst stacked, row1 = dst
    src = edge_index[0].astype(jnp.int32)
    dst = edge_index[1].astype(jnp.int32)
    eidx = jnp.zeros((8, TWO_E), jnp.int32)
    eidx = eidx.at[0, :].set(jnp.concatenate([src, dst]))
    eidx = eidx.at[1, :e].set(dst)

    vmem = pl.BlockSpec(memory_space=pltpu.MemorySpace.VMEM)
    out = pl.pallas_call(
        multi_observer_kernel,
        out_shape=jax.ShapeDtypeStruct((n, OUT_PAD), jnp.float32),
        in_specs=[vmem] * 4,
        out_specs=vmem,
    )(eidx, packed["wbuf"], packed["rbuf"], x)
    return out[:, :OUTPUT_DIM]                        # drop lane padding


def reference(x, edge_index, p):
    """Pure-JAX (f32) mirror of the PyTorch forward, for a sanity check."""
    h = jax.nn.relu(x @ p["w_ft"] + p["b_ft"][0])
    pos = h[:, :3]
    src, dst = edge_index[0], edge_index[1]
    x_j = h[src]
    delta = pos[src] - pos[dst]
    dist = jnp.linalg.norm(delta, axis=1, keepdims=True)
    transformed = x_j @ p["w_cv"] + p["b_cv"][0]
    dsum = jnp.sum(delta / (dist + 1e-8), axis=1, keepdims=True)
    views = []
    for i in range(NUM_OBSERVERS):
        v_rel = VELOCITY_FACTOR * jnp.clip(dist / dist.max(), 0.0, p["vels"][i])
        gamma = 1.0 / jnp.sqrt(1.0 - v_rel ** 2 + 1e-8)
        ab = 1.0 / (gamma * (1.0 + v_rel * dsum))
        msgs = transformed * ab
        agg = jnp.zeros((x.shape[0], HIDDEN_DIM), jnp.float32).at[dst].add(msgs)
        mean = agg.mean(0)
        var = ((agg - mean) ** 2).mean(0)
        view = (agg - mean) / jnp.sqrt(var + BN_EPS) * p["bn_g"][i] + p["bn_b"][i]
        view = jax.nn.relu(view) * jax.nn.softmax(p["att"][i])
        views.append(view)
    comb = jnp.concatenate(views, axis=1)
    z = comb @ p["w1"] + p["b1"][0]
    mu = z.mean(1, keepdims=True)
    var = ((z - mu) ** 2).mean(1, keepdims=True)
    z = jax.nn.relu((z - mu) / jnp.sqrt(var + LN_EPS) * p["ln_g"][0] + p["ln_b"][0])
    return z @ p["w2"] + p["b2"][0]


if __name__ == "__main__":
    key = jax.random.PRNGKey(0)
    k_x, k_e, k_p = jax.random.split(key, 3)

    x = jax.random.normal(k_x, (N_NODES, FEATURE_DIM), jnp.float32)
    edge_index = jax.random.randint(k_e, (2, N_EDGES), 0, N_NODES, jnp.int32)
    params = init_params(k_p)
    packed = pack_params(params)          # one-time host-side param packing

    out = jax.block_until_ready(multi_observer_gnn(x, edge_index, packed))

    assert out.shape == (N_NODES, OUTPUT_DIM)
    assert bool(jnp.all(jnp.isfinite(out)))

    ref = jax.block_until_ready(reference(x, edge_index, params))
    max_err = float(jnp.max(jnp.abs(out - ref)))
    # bf16 matmul operands (per perf feedback) + approx EUP reciprocals raise the
    # expected deviation to ~1e-2 vs. the pure-f32 reference; real bugs are O(1).
    assert bool(jnp.allclose(out, ref, rtol=3e-2, atol=3e-2)), f"max abs diff {max_err}"

    print("KERNEL_OK")
</pallas_src>

<mosaic_0001>
module attributes {stable_mosaic.version = 11 : i64} {
  func.func @multi_observer_kernel(%arg0: memref<8x128xi32, #tpu.memory_space<vmem>>, %arg1: memref<304x128xf32, #tpu.memory_space<vmem>>, %arg2: memref<9x128xf32, #tpu.memory_space<vmem>>, %arg3: memref<32x16xf32, #tpu.memory_space<vmem>>, %arg4: memref<32x128xf32, #tpu.memory_space<vmem>>) attributes {dimension_semantics = [], scalar_prefetch = 0 : i64, scratch_operands = 0 : i64, tpu.core_type = #tpu.core_type<tc>} {
    %c0 = arith.constant 0 : index
    %c0_0 = arith.constant 0 : index
    %0 = vector.load %arg1[%c0, %c0_0] : memref<304x128xf32, #tpu.memory_space<vmem>>, vector<16x32xf32>
    %c16 = arith.constant 16 : index
    %c0_1 = arith.constant 0 : index
    %1 = vector.load %arg1[%c16, %c0_1] : memref<304x128xf32, #tpu.memory_space<vmem>>, vector<32x128xf32>
    %2 = arith.truncf %1 : vector<32x128xf32> to vector<32x128xbf16>
    %c48 = arith.constant 48 : index
    %c0_2 = arith.constant 0 : index
    %3 = vector.load %arg1[%c48, %c0_2] : memref<304x128xf32, #tpu.memory_space<vmem>>, vector<128x128xf32>
    %4 = arith.truncf %3 : vector<128x128xf32> to vector<128x128xbf16>
    %c176 = arith.constant 176 : index
    %c0_3 = arith.constant 0 : index
    %5 = vector.load %arg1[%c176, %c0_3] : memref<304x128xf32, #tpu.memory_space<vmem>>, vector<128x128xf32>
    %c0_4 = arith.constant 0 : index
    %c0_5 = arith.constant 0 : index
    %6 = vector.load %arg2[%c0_4, %c0_5] : memref<9x128xf32, #tpu.memory_space<vmem>>, vector<1x32xf32>
    %c1 = arith.constant 1 : index
    %c0_6 = arith.constant 0 : index
    %7 = vector.load %arg2[%c1, %c0_6] : memref<9x128xf32, #tpu.memory_space<vmem>>, vector<1x128xf32>
    %c2 = arith.constant 2 : index
    %c0_7 = arith.constant 0 : index
    %8 = vector.load %arg2[%c2, %c0_7] : memref<9x128xf32, #tpu.memory_space<vmem>>, vector<1x128xf32>
    %c3 = arith.constant 3 : index
    %c0_8 = arith.constant 0 : index
    %9 = vector.load %arg2[%c3, %c0_8] : memref<9x128xf32, #tpu.memory_space<vmem>>, vector<1x128xf32>
    %c4 = arith.constant 4 : index
    %c0_9 = arith.constant 0 : index
    %10 = vector.load %arg2[%c4, %c0_9] : memref<9x128xf32, #tpu.memory_space<vmem>>, vector<1x128xf32>
    %c5 = arith.constant 5 : index
    %c0_10 = arith.constant 0 : index
    %11 = vector.load %arg2[%c5, %c0_10] : memref<9x128xf32, #tpu.memory_space<vmem>>, vector<1x128xf32>
    %c6 = arith.constant 6 : index
    %c0_11 = arith.constant 0 : index
    %12 = vector.load %arg2[%c6, %c0_11] : memref<9x128xf32, #tpu.memory_space<vmem>>, vector<1x128xf32>
    %c7 = arith.constant 7 : index
    %c0_12 = arith.constant 0 : index
    %13 = vector.load %arg2[%c7, %c0_12] : memref<9x128xf32, #tpu.memory_space<vmem>>, vector<1x128xf32>
    %c8 = arith.constant 8 : index
    %c0_13 = arith.constant 0 : index
    %14 = vector.load %arg2[%c8, %c0_13] : memref<9x128xf32, #tpu.memory_space<vmem>>, vector<1x128xf32>
    %c0_14 = arith.constant 0 : index
    %c0_15 = arith.constant 0 : index
    %15 = vector.load %arg3[%c0_14, %c0_15] : memref<32x16xf32, #tpu.memory_space<vmem>>, vector<32x16xf32>
    %cst = arith.constant dense<0.000000e+00> : vector<32x32xf32>
    %16 = tpu.matmul %15, %0, %cst {dimension_numbers = #tpu.dot_dimension_numbers<[1], [0], [0], [1], [0, 0, 1, 1], [], []>} : vector<32x16xf32>, vector<16x32xf32>, vector<32x32xf32> -> vector<32x32xf32>
    %17 = vector.broadcast %6 : vector<1x32xf32> to vector<32x32xf32>
    %18 = arith.addf %16, %17 : vector<32x32xf32>
    %cst_16 = arith.constant 0.000000e+00 : f32
    %19 = vector.broadcast %cst_16 : f32 to vector<32x32xf32>
    %20 = arith.maximumf %18, %19 : vector<32x32xf32>
    %c0_17 = arith.constant 0 : index
    %c0_18 = arith.constant 0 : index
    %21 = vector.load %arg0[%c0_17, %c0_18] : memref<8x128xi32, #tpu.memory_space<vmem>>, vector<1x128xi32>
    %c1_19 = arith.constant 1 : index
    %c0_20 = arith.constant 0 : index
    %22 = vector.load %arg0[%c1_19, %c0_20] : memref<8x128xi32, #tpu.memory_space<vmem>>, vector<1x64xi32>
    %23 = tpu.iota {dimensions = array<i32: 0>} : vector<32x128xi32>
    %24 = vector.broadcast %21 : vector<1x128xi32> to vector<32x128xi32>
    %25 = arith.cmpi eq, %23, %24 : vector<32x128xi32>
    %26 = arith.extui %25 : vector<32x128xi1> to vector<32x128xi32>
    %27 = arith.sitofp %26 : vector<32x128xi32> to vector<32x128xf32>
    %28 = tpu.iota {dimensions = array<i32: 0>} : vector<32x64xi32>
    %29 = vector.broadcast %22 : vector<1x64xi32> to vector<32x64xi32>
    %30 = arith.cmpi eq, %28, %29 : vector<32x64xi32>
    %31 = arith.extui %30 : vector<32x64xi1> to vector<32x64xi32>
    %32 = arith.sitofp %31 : vector<32x64xi32> to vector<32x64xf32>
    %33 = arith.truncf %32 : vector<32x64xf32> to vector<32x64xbf16>
    %34 = tpu.transpose %27, [1, 0] : vector<32x128xf32> -> vector<128x32xf32>
    %cst_21 = arith.constant dense<0.000000e+00> : vector<128x32xf32>
    %35 = tpu.matmul %34, %20, %cst_21 {dimension_numbers = #tpu.dot_dimension_numbers<[1], [0], [0], [1], [0, 0, 1, 1], [], []>} : vector<128x32xf32>, vector<32x32xf32>, vector<128x32xf32> -> vector<128x32xf32>
    %36 = vector.extract_strided_slice %35 {offsets = [0, 0], sizes = [64, 32], strides = [1, 1]} : vector<128x32xf32> to vector<64x32xf32>
    %37 = vector.extract_strided_slice %35 {offsets = [0, 0], sizes = [64, 3], strides = [1, 1]} : vector<128x32xf32> to vector<64x3xf32>
    %38 = vector.extract_strided_slice %35 {offsets = [64, 0], sizes = [64, 3], strides = [1, 1]} : vector<128x32xf32> to vector<64x3xf32>
    %39 = arith.subf %37, %38 : vector<64x3xf32>
    %40 = arith.mulf %39, %39 : vector<64x3xf32>
    %cst_22 = arith.constant dense<0.000000e+00> : vector<64xf32>
    %41 = vector.multi_reduction <add>, %40, %cst_22 [1] : vector<64x3xf32> to vector<64xf32>
    %42 = vector.shape_cast %41 : vector<64xf32> to vector<64x1xf32>
    %43 = math.sqrt %42 : vector<64x1xf32>
    %cst_23 = arith.constant dense<0xFF800000> : vector<1xf32>
    %44 = vector.multi_reduction <maximumf>, %43, %cst_23 [0] : vector<64x1xf32> to vector<1xf32>
    %45 = vector.shape_cast %44 : vector<1xf32> to vector<1x1xf32>
    %cst_24 = arith.constant 9.99999993E-9 : f32
    %46 = vector.broadcast %cst_24 : f32 to vector<1x1xf32>
    %47 = arith.maximumf %45, %46 : vector<1x1xf32>
    %48 = tpu.reciprocal %47 {approx = true} : vector<1x1xf32> -> vector<1x1xf32>
    %49 = vector.broadcast %48 : vector<1x1xf32> to vector<64x1xf32>
    %50 = arith.mulf %43, %49 : vector<64x1xf32>
    %cst_25 = arith.constant dense<0.000000e+00> : vector<64xf32>
    %51 = vector.multi_reduction <add>, %39, %cst_25 [1] : vector<64x3xf32> to vector<64xf32>
    %52 = vector.shape_cast %51 : vector<64xf32> to vector<64x1xf32>
    %cst_26 = arith.constant 9.99999993E-9 : f32
    %53 = vector.broadcast %cst_26 : f32 to vector<64x1xf32>
    %54 = arith.addf %43, %53 : vector<64x1xf32>
    %55 = tpu.reciprocal %54 {approx = true} : vector<64x1xf32> -> vector<64x1xf32>
    %56 = arith.mulf %52, %55 : vector<64x1xf32>
    %cst_27 = arith.constant 0.000000e+00 : f32
    %57 = vector.broadcast %cst_27 : f32 to vector<64x1xf32>
    %58 = arith.maximumf %50, %57 : vector<64x1xf32>
    %59 = vector.broadcast %58 : vector<64x1xf32> to vector<64x128xf32>
    %60 = vector.broadcast %14 : vector<1x128xf32> to vector<64x128xf32>
    %61 = arith.minimumf %59, %60 : vector<64x128xf32>
    %cst_28 = arith.constant 5.000000e-01 : f32
    %62 = vector.broadcast %cst_28 : f32 to vector<64x128xf32>
    %63 = arith.mulf %62, %61 : vector<64x128xf32>
    %64 = arith.mulf %63, %63 : vector<64x128xf32>
    %cst_29 = arith.constant 1.000000e+00 : f32
    %65 = vector.broadcast %cst_29 : f32 to vector<64x128xf32>
    %66 = arith.subf %65, %64 : vector<64x128xf32>
    %cst_30 = arith.constant 9.99999993E-9 : f32
    %67 = vector.broadcast %cst_30 : f32 to vector<64x128xf32>
    %68 = arith.addf %66, %67 : vector<64x128xf32>
    %69 = math.sqrt %68 : vector<64x128xf32>
    %70 = vector.broadcast %56 : vector<64x1xf32> to vector<64x128xf32>
    %71 = arith.mulf %63, %70 : vector<64x128xf32>
    %cst_31 = arith.constant 1.000000e+00 : f32
    %72 = vector.broadcast %cst_31 : f32 to vector<64x128xf32>
    %73 = arith.addf %72, %71 : vector<64x128xf32>
    %74 = arith.divf %69, %73 : vector<64x128xf32>
    %75 = arith.truncf %36 : vector<64x32xf32> to vector<64x32xbf16>
    %cst_32 = arith.constant dense<0.000000e+00> : vector<64x128xf32>
    %76 = tpu.matmul %75, %2, %cst_32 {dimension_numbers = #tpu.dot_dimension_numbers<[1], [0], [0], [1], [0, 0, 1, 1], [], []>} : vector<64x32xbf16>, vector<32x128xbf16>, vector<64x128xf32> -> vector<64x128xf32>
    %77 = vector.broadcast %7 : vector<1x128xf32> to vector<64x128xf32>
    %78 = arith.addf %76, %77 : vector<64x128xf32>
    %79 = arith.mulf %78, %74 : vector<64x128xf32>
    %80 = arith.truncf %79 : vector<64x128xf32> to vector<64x128xbf16>
    %cst_33 = arith.constant dense<0.000000e+00> : vector<32x128xf32>
    %81 = tpu.matmul %33, %80, %cst_33 {dimension_numbers = #tpu.dot_dimension_numbers<[1], [0], [0], [1], [0, 0, 1, 1], [], []>} : vector<32x64xbf16>, vector<64x128xbf16>, vector<32x128xf32> -> vector<32x128xf32>
    %cst_34 = arith.constant 3.125000e-02 : f32
    %82 = vector.broadcast %cst_34 : f32 to vector<32x32xf32>
    %cst_35 = arith.constant dense<0.000000e+00> : vector<32x128xf32>
    %83 = tpu.matmul %82, %81, %cst_35 {dimension_numbers = #tpu.dot_dimension_numbers<[1], [0], [0], [1], [0, 0, 1, 1], [], []>} : vector<32x32xf32>, vector<32x128xf32>, vector<32x128xf32> -> vector<32x128xf32>
    %84 = arith.subf %81, %83 : vector<32x128xf32>
    %85 = arith.mulf %84, %84 : vector<32x128xf32>
    %cst_36 = arith.constant dense<0.000000e+00> : vector<32x128xf32>
    %86 = tpu.matmul %82, %85, %cst_36 {dimension_numbers = #tpu.dot_dimension_numbers<[1], [0], [0], [1], [0, 0, 1, 1], [], []>} : vector<32x32xf32>, vector<32x128xf32>, vector<32x128xf32> -> vector<32x128xf32>
    %cst_37 = arith.constant 9.99999974E-6 : f32
    %87 = vector.broadcast %cst_37 : f32 to vector<32x128xf32>
    %88 = arith.addf %86, %87 : vector<32x128xf32>
    %89 = math.rsqrt %88 : vector<32x128xf32>
    %90 = arith.mulf %84, %89 : vector<32x128xf32>
    %91 = vector.broadcast %8 : vector<1x128xf32> to vector<32x128xf32>
    %92 = arith.mulf %90, %91 : vector<32x128xf32>
    %93 = vector.broadcast %9 : vector<1x128xf32> to vector<32x128xf32>
    %94 = arith.addf %92, %93 : vector<32x128xf32>
    %cst_38 = arith.constant 0.000000e+00 : f32
    %95 = vector.broadcast %cst_38 : f32 to vector<32x128xf32>
    %96 = arith.maximumf %94, %95 : vector<32x128xf32>
    %97 = arith.truncf %96 : vector<32x128xf32> to vector<32x128xbf16>
    %cst_39 = arith.constant dense<0.000000e+00> : vector<32x128xf32>
    %98 = tpu.matmul %97, %4, %cst_39 {dimension_numbers = #tpu.dot_dimension_numbers<[1], [0], [0], [1], [0, 0, 1, 1], [], []>} : vector<32x128xbf16>, vector<128x128xbf16>, vector<32x128xf32> -> vector<32x128xf32>
    %99 = vector.broadcast %10 : vector<1x128xf32> to vector<32x128xf32>
    %100 = arith.addf %98, %99 : vector<32x128xf32>
    %cst_40 = arith.constant 1.562500e-02 : f32
    %101 = vector.broadcast %cst_40 : f32 to vector<128x128xf32>
    %cst_41 = arith.constant dense<0.000000e+00> : vector<32x128xf32>
    %102 = tpu.matmul %100, %101, %cst_41 {dimension_numbers = #tpu.dot_dimension_numbers<[1], [0], [0], [1], [0, 0, 1, 1], [], []>} : vector<32x128xf32>, vector<128x128xf32>, vector<32x128xf32> -> vector<32x128xf32>
    %103 = arith.mulf %100, %100 : vector<32x128xf32>
    %cst_42 = arith.constant dense<0.000000e+00> : vector<32x128xf32>
    %104 = tpu.matmul %103, %101, %cst_42 {dimension_numbers = #tpu.dot_dimension_numbers<[1], [0], [0], [1], [0, 0, 1, 1], [], []>} : vector<32x128xf32>, vector<128x128xf32>, vector<32x128xf32> -> vector<32x128xf32>
    %105 = arith.subf %100, %102 : vector<32x128xf32>
    %106 = arith.mulf %102, %102 : vector<32x128xf32>
    %107 = arith.subf %104, %106 : vector<32x128xf32>
    %cst_43 = arith.constant 9.99999974E-6 : f32
    %108 = vector.broadcast %cst_43 : f32 to vector<32x128xf32>
    %109 = arith.addf %107, %108 : vector<32x128xf32>
    %110 = math.rsqrt %109 : vector<32x128xf32>
    %111 = arith.mulf %105, %110 : vector<32x128xf32>
    %112 = vector.broadcast %11 : vector<1x128xf32> to vector<32x128xf32>
    %113 = arith.mulf %111, %112 : vector<32x128xf32>
    %114 = vector.broadcast %12 : vector<1x128xf32> to vector<32x128xf32>
    %115 = arith.addf %113, %114 : vector<32x128xf32>
    %cst_44 = arith.constant 0.000000e+00 : f32
    %116 = vector.broadcast %cst_44 : f32 to vector<32x128xf32>
    %117 = arith.maximumf %115, %116 : vector<32x128xf32>
    %cst_45 = arith.constant dense<0.000000e+00> : vector<32x128xf32>
    %118 = tpu.matmul %117, %5, %cst_45 {dimension_numbers = #tpu.dot_dimension_numbers<[1], [0], [0], [1], [0, 0, 1, 1], [], []>} : vector<32x128xf32>, vector<128x128xf32>, vector<32x128xf32> -> vector<32x128xf32>
    %119 = vector.broadcast %13 : vector<1x128xf32> to vector<32x128xf32>
    %120 = arith.addf %118, %119 : vector<32x128xf32>
    %c0_46 = arith.constant 0 : index
    %c0_47 = arith.constant 0 : index
    %121 = vector.load %arg4[%c0_46, %c0_47] : memref<32x128xf32, #tpu.memory_space<vmem>>, vector<32x128xf32>
    tpu.vector_store %arg4[%c0_46, %c0_47], %120 {strides = array<i32>} : memref<32x128xf32, #tpu.memory_space<vmem>>, vector<32x128xf32>,
    return
  }
}

</mosaic_0001>

<llo_original>
// kernel: multi_observer_gnn.1
$region0: #{multi_observer_gnn.1}
  #allocation0 [shape = 'u32[]', space=smem, size = 0x4, offset = 0x4, fixed_abs, tag = 'smem constant byte address 0x4 - core index']
  #allocation1 [shape = 'u32[72,128]{1,0:T(1,128)}', space=vmem, size = 0x9000, scoped, tag = 'internal scratch']
  %s0 = inlined_call_operand.vmem [shape: s32[8,128], index: 0, kind: input, shape index: {}]
  %s1 = inlined_call_operand.hbm [shape: f32[304,128], index: 1, kind: input, shape index: {}]
  %s2 = inlined_call_operand.vmem [shape: f32[9,128], index: 2, kind: input, shape index: {}]
  %s3 = inlined_call_operand.vmem [shape: f32[32,16], index: 3, kind: input, shape index: {}]
  %s4 = inlined_call_operand.vmem [shape: f32[32,128], index: 4, kind: output, shape index: {}]
  %s5 = sld [smem:[#allocation0]]
  $region30: #{multi_observer_gnn.1} parent=0
    _
  %s7 = ssub.s32 1, %s5
  %s8 = scalar_select 0, %s7, %s5
  $region1: #{multi_observer_gnn.1} parent=0
    #allocation2 [shape = 'u8[155648]{0}', space=vmem, size = 0x26000, scoped, tag = 'input window, operand 1, single buffered']
    #allocation3 [shape = 's32[1]{0}', space=sflag, size = 0x4, scoped, tag = 'scoped memory for multi_observer_gnn.1']
    %9 = vsyncpa [#allocation3], 0
    // Predicated region
    $region2: #{multi_observer_gnn.1} parent=1 // pred_check
      _
    $region3: #{multi_observer_gnn.1} parent=1 // pred_check_branch
      %11 = sbr.rel (0) target = $region5
    $region4: #{multi_observer_gnn.1} parent=1 // pred_region
      _
    $region5: #{multi_observer_gnn.1} parent=1 // pred_fallthru
      _
    // Predicated region
    $region6: #{multi_observer_gnn.1} parent=1 // pred_check
      _
    $region7: #{multi_observer_gnn.1} parent=1 // pred_check_branch
      %13 = sbr.rel (0) target = $region9
    $region8: #{multi_observer_gnn.1} parent=1 // pred_region
      %15 = vsyncadd [#allocation3], 0
      %s16 = sshll.u32 %s1, 4
      %s17 = int_to_ptr.hbm [resolvable:$true] %s16
      %s18 = sshll.u32 [#allocation2], 4
      %s19 = int_to_ptr.vmem [resolvable:$true] %s18
      %24 = dma.hbm_to_vmem [thread:$0]  %s17, 4864, %s19, [#allocation3], 128, 128, 8
    $region9: #{multi_observer_gnn.1} parent=1 // pred_fallthru
      _
    // Predicated region
    $region10: #{multi_observer_gnn.1} parent=1 // pred_check
      _
    $region11: #{multi_observer_gnn.1} parent=1 // pred_check_branch
      %26 = sbr.rel (0) target = $region13
    $region12: #{multi_observer_gnn.1} parent=1 // pred_region
      _
    $region13: #{multi_observer_gnn.1} parent=1 // pred_fallthru
      _
    // Predicated region
    $region14: #{multi_observer_gnn.1} parent=1 // pred_check
      _
    $region15: #{multi_observer_gnn.1} parent=1 // pred_check_branch
      %28 = sbr.rel (0) target = $region17
    $region16: #{multi_observer_gnn.1} parent=1 // pred_region
      _
    $region17: #{multi_observer_gnn.1} parent=1 // pred_fallthru
      _
    // Predicated region
    $region18: #{multi_observer_gnn.1} parent=1 // pred_check
      _
    $region19: #{multi_observer_gnn.1} parent=1 // pred_check_branch
      %30 = sbr.rel (0) target = $region21
    $region20: #{multi_observer_gnn.1} parent=1 // pred_region
      %32 = dma.done [#allocation3], 4864
    $region21: #{multi_observer_gnn.1} parent=1 // pred_fallthru
      _
    %v34 = vld [vmem:[#allocation2] sm:$0xff]
    %v35 = vld [vmem:[#allocation2 + $0x8] sm:$0xff]
    %v36 = vld [vmem:[#allocation2 + $0x10] sm:$0xff]
    %v37 = vld [vmem:[#allocation2 + $0x18] sm:$0xff]
    %v38 = vld [vmem:[#allocation2 + $0x20] sm:$0xff]
    %v39 = vld [vmem:[#allocation2 + $0x28] sm:$0xff]
    %v40 = vpack.c.bf16 %v37, %v36
    %v41 = vpack.c.bf16 %v39, %v38
    %v42 = vld [vmem:[#allocation2 + $0x30] sm:$0xff]
    %v43 = vld [vmem:[#allocation2 + $0x38] sm:$0xff]
    %v44 = vld [vmem:[#allocation2 + $0x40] sm:$0xff]
    %v45 = vld [vmem:[#allocation2 + $0x48] sm:$0xff]
    %v46 = vld [vmem:[#allocation2 + $0x50] sm:$0xff]
    %v47 = vld [vmem:[#allocation2 + $0x58] sm:$0xff]
    %v48 = vld [vmem:[#allocation2 + $0x60] sm:$0xff]
    %v49 = vld [vmem:[#allocation2 + $0x68] sm:$0xff]
    %v50 = vld [vmem:[#allocation2 + $0x70] sm:$0xff]
    %v51 = vld [vmem:[#allocation2 + $0x78] sm:$0xff]
    %v52 = vld [vmem:[#allocation2 + $0x80] sm:$0xff]
    %v53 = vld [vmem:[#allocation2 + $0x88] sm:$0xff]
    %v54 = vld [vmem:[#allocation2 + $0x90] sm:$0xff]
    %v55 = vld [vmem:[#allocation2 + $0x98] sm:$0xff]
    %v56 = vld [vmem:[#allocation2 + $0xa0] sm:$0xff]
    %v57 = vld [vmem:[#allocation2 + $0xa8] sm:$0xff]
    %v58 = vpack.c.bf16 %v43, %v42
    %v59 = vpack.c.bf16 %v45, %v44
    %v60 = vpack.c.bf16 %v47, %v46
    %v61 = vpack.c.bf16 %v49, %v48
    %v62 = vpack.c.bf16 %v51, %v50
    %v63 = vpack.c.bf16 %v53, %v52
    %v64 = vpack.c.bf16 %v55, %v54
    %v65 = vpack.c.bf16 %v57, %v56
    %v66 = vld [vmem:[#allocation2 + $0xb0] sm:$0xff]
    %v67 = vld [vmem:[#allocation2 + $0xb8] sm:$0xff]
    %v68 = vld [vmem:[#allocation2 + $0xc0] sm:$0xff]
    %v69 = vld [vmem:[#allocation2 + $0xc8] sm:$0xff]
    %v70 = vld [vmem:[#allocation2 + $0xd0] sm:$0xff]
    %v71 = vld [vmem:[#allocation2 + $0xd8] sm:$0xff]
    %v72 = vld [vmem:[#allocation2 + $0xe0] sm:$0xff]
    %v73 = vld [vmem:[#allocation2 + $0xe8] sm:$0xff]
    %v74 = vld [vmem:[#allocation2 + $0xf0] sm:$0xff]
    %v75 = vld [vmem:[#allocation2 + $0xf8] sm:$0xff]
    %v76 = vld [vmem:[#allocation2 + $0x100] sm:$0xff]
    %v77 = vld [vmem:[#allocation2 + $0x108] sm:$0xff]
    %v78 = vld [vmem:[#allocation2 + $0x110] sm:$0xff]
    %v79 = vld [vmem:[#allocation2 + $0x118] sm:$0xff]
    %v80 = vld [vmem:[#allocation2 + $0x120] sm:$0xff]
    %v81 = vld [vmem:[#allocation2 + $0x128] sm:$0xff]
    %v82 = vld [vmem:[%s2] sm:$0x1]
    %v83 = vld [vmem:[%s2 + $0x1] sm:$0x1]
    %v84 = vld [vmem:[%s2 + $0x2] sm:$0x1]
    %v85 = vld [vmem:[%s2 + $0x3] sm:$0x1]
    %v86 = vld [vmem:[%s2 + $0x4] sm:$0x1]
    %v87 = vld [vmem:[%s2 + $0x5] sm:$0x1]
    %v88 = vld [vmem:[%s2 + $0x6] sm:$0x1]
    %v89 = vld [vmem:[%s2 + $0x7] sm:$0x1]
    %v90 = vld [vmem:[%s2 + $0x8] sm:$0x1]
    %v91 = vld [vmem:[%s3] sm:$0xff]
    %v92 = vld [vmem:[%s3 + $0x8] sm:$0xff]
    %v93 = vld [vmem:[%s3 + $0x10] sm:$0xff]
    %v94 = vld [vmem:[%s3 + $0x18] sm:$0xff]
    %v95 = vperm.slane %v82, 0
    %vm96 = vcmask 130048
    %v98 = vsel %vm96, %v91, 0
    %v101 = vsel %vm96, %v92, 0
    %v104 = vsel %vm96, %v93, 0
    %v107 = vsel %vm96, %v94, 0
    %109 = vmatpush.msra.mxu0 0.0
    %110 = vmatpush.msra.mxu0 0.0
    %111 = vmatpush.msra.mxu0 0.0
    %112 = vmatpush.msra.mxu0 0.0
    %113 = vmatpush.msra.mxu0 0.0
    %114 = vmatpush.msra.mxu0 0.0
    %115 = vmatpush.msra.mxu0 0.0
    %116 = vmatpush.msra.mxu0 0.0
    %117 = vmatpush.msra.mxu0 0.0
    %118 = vmatpush.msra.mxu0 0.0
    %119 = vmatpush.msra.mxu0 0.0
    %120 = vmatpush.msra.mxu0 0.0
    %121 = vmatpush.msra.mxu0 0.0
    %122 = vmatpush.msra.mxu0 0.0
    %123 = vmatpush.msra.mxu0 %v35
    %124 = vmatpush.msra.mxu0 %v34
    %125 = vmatmul.f32.gmra.mxu0 %v98
    %v126 = vpop.f32.mrf.mxu0
    %v127 = vadd.f32 %v95, %v126
    %128 = vmatmul.f32.gmra.mxu0 %v101
    %v129 = vpop.f32.mrf.mxu0
    %v130 = vadd.f32 %v95, %v129
    %131 = vmatmul.f32.gmra.mxu0 %v104
    %v132 = vpop.f32.mrf.mxu0
    %v133 = vadd.f32 %v95, %v132
    %134 = vmatmul.f32.gmra.mxu0 %v107
    %v135 = vpop.f32.mrf.mxu0
    %v136 = vadd.f32 %v95, %v135
    %137 = vdwg.mxu0
    %v138 = vmax.f32 %v127, 0.0
    %v139 = vmax.f32 %v130, 0.0
    %v140 = vmax.f32 %v133, 0.0
    %v141 = vmax.f32 %v136, 0.0
    %v142 = vld [vmem:[%s0] sm:$0x1]
    %v143 = vld [vmem:[%s0 + $0x1] sm:$0x1]
    %v144 = vlaneseq
    %v145 = vshrl.u32 %v144, 7
    %v146 = vadd.s32 %v145, 8
    %v147 = vadd.s32 %v145, 16
    %v148 = vadd.s32 %v145, 24
    %v149 = vperm.slane %v142, 0
    %vm150 = vcmp.eq.s32.totalorder %v145, %v149
    %vm151 = vcmp.eq.s32.totalorder %v146, %v149
    %vm152 = vcmp.eq.s32.totalorder %v147, %v149
    %vm153 = vcmp.eq.s32.totalorder %v148, %v149
    %v154 = vsel %vm150, 1, 0
    %v155 = vsel %vm151, 1, 0
    %v156 = vsel %vm152, 1, 0
    %v157 = vsel %vm153, 1, 0
    %v158 = vcvt.s32.f32 %v154
    %v159 = vcvt.s32.f32 %v155
    %v160 = vcvt.s32.f32 %v156
    %v161 = vcvt.s32.f32 %v157
    %v162 = vperm.slane %v143, 0
    %vm163 = vcmp.eq.s32.totalorder %v145, %v162
    %vm164 = vcmp.eq.s32.totalorder %v146, %v162
    %vm165 = vcmp.eq.s32.totalorder %v147, %v162
    %vm166 = vcmp.eq.s32.totalorder %v148, %v162
    %v167 = vsel %vm163, 1, 0
    %v168 = vsel %vm164, 1, 0
    %v169 = vsel %vm165, 1, 0
    %v170 = vsel %vm166, 1, 0
    %v171 = vcvt.s32.f32 %v167
    %v172 = vcvt.s32.f32 %v168
    %v173 = vcvt.s32.f32 %v169
    %v174 = vcvt.s32.f32 %v170
    %v175 = vpack.c.bf16 %v172, %v171
    %v176 = vpack.c.bf16 %v174, %v173
    %177 = vxpose.xlu0.b32.start [1/16] %v158, 128
    %178 = vxpose.xlu0.b32.cont [2/16] %v159, 128
    %179 = vxpose.xlu0.b32.cont [3/16] %v160, 128
    %180 = vxpose.xlu0.b32.cont [4/16] %v161, 128
    %181 = vxpose.xlu0.b32.cont [5/16] 0.0, 128
    %182 = vxpose.xlu0.b32.cont [6/16] 0.0, 128
    %183 = vxpose.xlu0.b32.cont [7/16] 0.0, 128
    %184 = vxpose.xlu0.b32.cont [8/16] 0.0, 128
    %185 = vxpose.xlu0.b32.cont [9/16] 0.0, 128
    %186 = vxpose.xlu0.b32.cont [10/16] 0.0, 128
    %187 = vxpose.xlu0.b32.cont [11/16] 0.0, 128
    %188 = vxpose.xlu0.b32.cont [12/16] 0.0, 128
    %189 = vxpose.xlu0.b32.cont [13/16] 0.0, 128
    %190 = vxpose.xlu0.b32.cont [14/16] 0.0, 128
    %191 = vxpose.xlu0.b32.cont [15/16] 0.0, 128
    %192 = vxpose.xlu0.b32.end [16/16] 0.0, 128
    %v193 = vpop.trf.xlu0
    %v194 = vpop.trf.xlu0
    %v195 = vpop.trf.xlu0
    %v196 = vpop.trf.xlu0
    %v197 = vpop.trf.xlu0
    %v198 = vpop.trf.xlu0
    %v199 = vpop.trf.xlu0
    %v200 = vpop.trf.xlu0
    %v201 = vpop.trf.xlu0
    %v202 = vpop.trf.xlu0
    %v203 = vpop.trf.xlu0
    %v204 = vpop.trf.xlu0
    %v205 = vpop.trf.xlu0
    %v206 = vpop.trf.xlu0
    %v207 = vpop.trf.xlu0
    %v208 = vpop.trf.xlu0
    %vm209 = vcmask 261120
    %v211 = vsel %vm209, %v193, 0
    %v214 = vsel %vm209, %v194, 0
    %v217 = vsel %vm209, %v195, 0
    %v220 = vsel %vm209, %v196, 0
    %v223 = vsel %vm209, %v197, 0
    %v226 = vsel %vm209, %v198, 0
    %v229 = vsel %vm209, %v199, 0
    %v232 = vsel %vm209, %v200, 0
    %v235 = vsel %vm209, %v201, 0
    %v238 = vsel %vm209, %v202, 0
    %v241 = vsel %vm209, %v203, 0
    %v244 = vsel %vm209, %v204, 0
    %v247 = vsel %vm209, %v205, 0
    %v250 = vsel %vm209, %v206, 0
    %v253 = vsel %vm209, %v207, 0
    %v256 = vsel %vm209, %v208, 0
    %258 = vmatpush.msra.mxu0 0.0
    %259 = vmatpush.msra.mxu0 0.0
    %260 = vmatpush.msra.mxu0 0.0
    %261 = vmatpush.msra.mxu0 0.0
    %262 = vmatpush.msra.mxu0 0.0
    %263 = vmatpush.msra.mxu0 0.0
    %264 = vmatpush.msra.mxu0 0.0
    %265 = vmatpush.msra.mxu0 0.0
    %266 = vmatpush.msra.mxu0 0.0
    %267 = vmatpush.msra.mxu0 0.0
    %268 = vmatpush.msra.mxu0 0.0
    %269 = vmatpush.msra.mxu0 0.0
    %270 = vmatpush.msra.mxu0 %v141
    %271 = vmatpush.msra.mxu0 %v140
    %272 = vmatpush.msra.mxu0 %v139
    %273 = vmatpush.msra.mxu0 %v138
    %274 = vmatmul.f32.gmra.mxu0 %v211
    %v275 = vpop.f32.mrf.mxu0
    %v276 = vadd.f32 0.0, %v275
    %277 = vmatmul.f32.gmra.mxu0 %v214
    %v278 = vpop.f32.mrf.mxu0
    %v279 = vadd.f32 0.0, %v278
    %280 = vmatmul.f32.gmra.mxu0 %v217
    %v281 = vpop.f32.mrf.mxu0
    %v282 = vadd.f32 0.0, %v281
    %283 = vmatmul.f32.gmra.mxu0 %v220
    %v284 = vpop.f32.mrf.mxu0
    %v285 = vadd.f32 0.0, %v284
    %286 = vmatmul.f32.gmra.mxu0 %v223
    %v287 = vpop.f32.mrf.mxu0
    %v288 = vadd.f32 0.0, %v287
    %289 = vmatmul.f32.gmra.mxu0 %v226
    %v290 = vpop.f32.mrf.mxu0
    %v291 = vadd.f32 0.0, %v290
    %292 = vmatmul.f32.gmra.mxu0 %v229
    %v293 = vpop.f32.mrf.mxu0
    %v294 = vadd.f32 0.0, %v293
    %295 = vmatmul.f32.gmra.mxu0 %v232
    %v296 = vpop.f32.mrf.mxu0
    %v297 = vadd.f32 0.0, %v296
    %298 = vmatmul.f32.gmra.mxu0 %v235
    %v299 = vpop.f32.mrf.mxu0
    %v300 = vadd.f32 0.0, %v299
    %301 = vmatmul.f32.gmra.mxu0 %v238
    %v302 = vpop.f32.mrf.mxu0
    %v303 = vadd.f32 0.0, %v302
    %304 = vmatmul.f32.gmra.mxu0 %v241
    %v305 = vpop.f32.mrf.mxu0
    %v306 = vadd.f32 0.0, %v305
    %307 = vmatmul.f32.gmra.mxu0 %v244
    %v308 = vpop.f32.mrf.mxu0
    %v309 = vadd.f32 0.0, %v308
    %310 = vmatmul.f32.gmra.mxu0 %v247
    %v311 = vpop.f32.mrf.mxu0
    %v312 = vadd.f32 0.0, %v311
    %313 = vmatmul.f32.gmra.mxu0 %v250
    %v314 = vpop.f32.mrf.mxu0
    %v315 = vadd.f32 0.0, %v314
    %316 = vmatmul.f32.gmra.mxu0 %v253
    %v317 = vpop.f32.mrf.mxu0
    %v318 = vadd.f32 0.0, %v317
    %319 = vmatmul.f32.gmra.mxu0 %v256
    %v320 = vpop.f32.mrf.mxu0
    %v321 = vadd.f32 0.0, %v320
    %322 = vdwg.mxu0
    %v323 = vsub.f32 %v276, %v300
    %v324 = vsub.f32 %v279, %v303
    %v325 = vsub.f32 %v282, %v306
    %v326 = vsub.f32 %v285, %v309
    %v327 = vsub.f32 %v288, %v312
    %v328 = vsub.f32 %v291, %v315
    %v329 = vsub.f32 %v294, %v318
    %v330 = vsub.f32 %v297, %v321
    %v331 = vmul.f32 %v323, %v323
    %v332 = vmul.f32 %v324, %v324
    %v333 = vmul.f32 %v325, %v325
    %v334 = vmul.f32 %v326, %v326
    %v335 = vmul.f32 %v327, %v327
    %v336 = vmul.f32 %v328, %v328
    %v337 = vmul.f32 %v329, %v329
    %v338 = vmul.f32 %v330, %v330
    %vm339 = vcmask 23552
    %v340 = vsel %vm339, %v331, 0.0
    %341 = vadd.xlane.f32.xlu0 %v340
    %v342 = vpop.xlane.xlu0 %341
    %v343 = vsel %vm339, %v332, 0.0
    %344 = vadd.xlane.f32.xlu0 %v343
    %v345 = vpop.xlane.xlu0 %344
    %v346 = vsel %vm339, %v333, 0.0
    %347 = vadd.xlane.f32.xlu0 %v346
    %v348 = vpop.xlane.xlu0 %347
    %v349 = vsel %vm339, %v334, 0.0
    %350 = vadd.xlane.f32.xlu0 %v349
    %v351 = vpop.xlane.xlu0 %350
    %v352 = vsel %vm339, %v335, 0.0
    %353 = vadd.xlane.f32.xlu0 %v352
    %v354 = vpop.xlane.xlu0 %353
    %v355 = vsel %vm339, %v336, 0.0
    %356 = vadd.xlane.f32.xlu0 %v355
    %v357 = vpop.xlane.xlu0 %356
    %v358 = vsel %vm339, %v337, 0.0
    %359 = vadd.xlane.f32.xlu0 %v358
    %v360 = vpop.xlane.xlu0 %359
    %v361 = vsel %vm339, %v338, 0.0
    %362 = vadd.xlane.f32.xlu0 %v361
    %v363 = vpop.xlane.xlu0 %362
    %v364 = vrsqrt.pop %v342
    %v365 = vmul.f32 %v364, %v342
    %v366 = vmul.f32 %v365, %v364
    %v367 = vmul.f32 0.5, %v366
    %v368 = vsub.f32 1.5, %v367
    %v369 = vmul.f32 %v364, %v368
    %v370 = vmul.f32 %v342, %v369
    %vm371 = vcmp.eq.f32.partialorder %v342, inf
    %v372 = vsel %vm371, %v342, %v370
    %vm373 = vcmp.eq.f32.partialorder %v342, 0.0
    %v374 = vand.u32 %v342, 2147483648
    %v375 = vsel %vm373, %v374, %v372
    %v376 = vrsqrt.pop %v345
    %v377 = vmul.f32 %v376, %v345
    %v378 = vmul.f32 %v377, %v376
    %v379 = vmul.f32 0.5, %v378
    %v380 = vsub.f32 1.5, %v379
    %v381 = vmul.f32 %v376, %v380
    %v382 = vmul.f32 %v345, %v381
    %vm383 = vcmp.eq.f32.partialorder %v345, inf
    %v384 = vsel %vm383, %v345, %v382
    %vm385 = vcmp.eq.f32.partialorder %v345, 0.0
    %v386 = vand.u32 %v345, 2147483648
    %v387 = vsel %vm385, %v386, %v384
    %v388 = vrsqrt.pop %v348
    %v389 = vmul.f32 %v388, %v348
    %v390 = vmul.f32 %v389, %v388
    %v391 = vmul.f32 0.5, %v390
    %v392 = vsub.f32 1.5, %v391
    %v393 = vmul.f32 %v388, %v392
    %v394 = vmul.f32 %v348, %v393
    %vm395 = vcmp.eq.f32.partialorder %v348, inf
    %v396 = vsel %vm395, %v348, %v394
    %vm397 = vcmp.eq.f32.partialorder %v348, 0.0
    %v398 = vand.u32 %v348, 2147483648
    %v399 = vsel %vm397, %v398, %v396
    %v400 = vrsqrt.pop %v351
    %v401 = vmul.f32 %v400, %v351
    %v402 = vmul.f32 %v401, %v400
    %v403 = vmul.f32 0.5, %v402
    %v404 = vsub.f32 1.5, %v403
    %v405 = vmul.f32 %v400, %v404
    %v406 = vmul.f32 %v351, %v405
    %vm407 = vcmp.eq.f32.partialorder %v351, inf
    %v408 = vsel %vm407, %v351, %v406
    %vm409 = vcmp.eq.f32.partialorder %v351, 0.0
    %v410 = vand.u32 %v351, 2147483648
    %v411 = vsel %vm409, %v410, %v408
    %v412 = vrsqrt.pop %v354
    %v413 = vmul.f32 %v412, %v354
    %v414 = vmul.f32 %v413, %v412
    %v415 = vmul.f32 0.5, %v414
    %v416 = vsub.f32 1.5, %v415
    %v417 = vmul.f32 %v412, %v416
    %v418 = vmul.f32 %v354, %v417
    %vm419 = vcmp.eq.f32.partialorder %v354, inf
    %v420 = vsel %vm419, %v354, %v418
    %vm421 = vcmp.eq.f32.partialorder %v354, 0.0
    %v422 = vand.u32 %v354, 2147483648
    %v423 = vsel %vm421, %v422, %v420
    %v424 = vrsqrt.pop %v357
    %v425 = vmul.f32 %v424, %v357
    %v426 = vmul.f32 %v425, %v424
    %v427 = vmul.f32 0.5, %v426
    %v428 = vsub.f32 1.5, %v427
    %v429 = vmul.f32 %v424, %v428
    %v430 = vmul.f32 %v357, %v429
    %vm431 = vcmp.eq.f32.partialorder %v357, inf
    %v432 = vsel %vm431, %v357, %v430
    %vm433 = vcmp.eq.f32.partialorder %v357, 0.0
    %v434 = vand.u32 %v357, 2147483648
    %v435 = vsel %vm433, %v434, %v432
    %v436 = vrsqrt.pop %v360
    %v437 = vmul.f32 %v436, %v360
    %v438 = vmul.f32 %v437, %v436
    %v439 = vmul.f32 0.5, %v438
    %v440 = vsub.f32 1.5, %v439
    %v441 = vmul.f32 %v436, %v440
    %v442 = vmul.f32 %v360, %v441
    %vm443 = vcmp.eq.f32.partialorder %v360, inf
    %v444 = vsel %vm443, %v360, %v442
    %vm445 = vcmp.eq.f32.partialorder %v360, 0.0
    %v446 = vand.u32 %v360, 2147483648
    %v447 = vsel %vm445, %v446, %v444
    %v448 = vrsqrt.pop %v363
    %v449 = vmul.f32 %v448, %v363
    %v450 = vmul.f32 %v449, %v448
    %v451 = vmul.f32 0.5, %v450
    %v452 = vsub.f32 1.5, %v451
    %v453 = vmul.f32 %v448, %v452
    %v454 = vmul.f32 %v363, %v453
    %vm455 = vcmp.eq.f32.partialorder %v363, inf
    %v456 = vsel %vm455, %v363, %v454
    %vm457 = vcmp.eq.f32.partialorder %v363, 0.0
    %v458 = vand.u32 %v363, 2147483648
    %v459 = vsel %vm457, %v458, %v456
    %v460 = vmax.f32 %v375, %v423
    %v461 = vmax.f32 %v387, %v435
    %v462 = vmax.f32 %v399, %v447
    %v463 = vmax.f32 %v411, %v459
    %v464 = vmax.f32 %v460, %v461
    %v465 = vmax.f32 %v462, %v463
    %v466 = vmax.f32 %v464, %v465
    %v467 = vrot.slane %v466, 4
    %v468 = vmax.f32 %v466, %v467
    %v469 = vrot.slane %v468, 2
    %v470 = vmax.f32 %v468, %v469
    %v471 = vrot.slane %v470, 1
    %v472 = vmax.f32 %v470, %v471
    %v473 = vmax.f32 %v472, 1e-08
    %v474 = vrcp.pop %v473
    %v475 = vmul.f32 %v375, %v474
    %v476 = vmul.f32 %v387, %v474
    %v477 = vmul.f32 %v399, %v474
    %v478 = vmul.f32 %v411, %v474
    %v479 = vmul.f32 %v423, %v474
    %v480 = vmul.f32 %v435, %v474
    %v481 = vmul.f32 %v447, %v474
    %v482 = vmul.f32 %v459, %v474
    %v483 = vsel %vm339, %v323, 0.0
    %484 = vadd.xlane.f32.xlu0 %v483
    %v485 = vpop.xlane.xlu0 %484
    %v486 = vsel %vm339, %v324, 0.0
    %487 = vadd.xlane.f32.xlu0 %v486
    %v488 = vpop.xlane.xlu0 %487
    %v489 = vsel %vm339, %v325, 0.0
    %490 = vadd.xlane.f32.xlu0 %v489
    %v491 = vpop.xlane.xlu0 %490
    %v492 = vsel %vm339, %v326, 0.0
    %493 = vadd.xlane.f32.xlu0 %v492
    %v494 = vpop.xlane.xlu0 %493
    %v495 = vsel %vm339, %v327, 0.0
    %496 = vadd.xlane.f32.xlu0 %v495
    %v497 = vpop.xlane.xlu0 %496
    %v498 = vsel %vm339, %v328, 0.0
    %499 = vadd.xlane.f32.xlu0 %v498
    %v500 = vpop.xlane.xlu0 %499
    %v501 = vsel %vm339, %v329, 0.0
    %502 = vadd.xlane.f32.xlu0 %v501
    %v503 = vpop.xlane.xlu0 %502
    %v504 = vsel %vm339, %v330, 0.0
    %505 = vadd.xlane.f32.xlu0 %v504
    %v506 = vpop.xlane.xlu0 %505
    %v507 = vadd.f32 %v375, 1e-08
    %v508 = vadd.f32 %v387, 1e-08
    %v509 = vadd.f32 %v399, 1e-08
    %v510 = vadd.f32 %v411, 1e-08
    %v511 = vadd.f32 %v423, 1e-08
    %v512 = vadd.f32 %v435, 1e-08
    %v513 = vadd.f32 %v447, 1e-08
    %v514 = vadd.f32 %v459, 1e-08
    %v515 = vrcp.pop %v507
    %v516 = vrcp.pop %v508
    %v517 = vrcp.pop %v509
    %v518 = vrcp.pop %v510
    %v519 = vrcp.pop %v511
    %v520 = vrcp.pop %v512
    %v521 = vrcp.pop %v513
    %v522 = vrcp.pop %v514
    %v523 = vmul.f32 %v485, %v515
    %v524 = vmul.f32 %v488, %v516
    %v525 = vmul.f32 %v491, %v517
    %v526 = vmul.f32 %v494, %v518
    %v527 = vmul.f32 %v497, %v519
    %v528 = vmul.f32 %v500, %v520
    %v529 = vmul.f32 %v503, %v521
    %v530 = vmul.f32 %v506, %v522
    %v531 = vmax.f32 %v475, 0.0
    %v532 = vmax.f32 %v476, 0.0
    %v533 = vmax.f32 %v477, 0.0
    %v534 = vmax.f32 %v478, 0.0
    %v535 = vmax.f32 %v479, 0.0
    %v536 = vmax.f32 %v480, 0.0
    %v537 = vmax.f32 %v481, 0.0
    %v538 = vmax.f32 %v482, 0.0
    %v539 = vperm.slane %v90, 0
    %v540 = vmin.f32 %v531, %v539
    %v541 = vmin.f32 %v532, %v539
    %v542 = vmin.f32 %v533, %v539
    %v543 = vmin.f32 %v534, %v539
    %v544 = vmin.f32 %v535, %v539
    %v545 = vmin.f32 %v536, %v539
    %v546 = vmin.f32 %v537, %v539
    %v547 = vmin.f32 %v538, %v539
    %v548 = vmul.f32 %v540, 0.5
    %v549 = vmul.f32 %v541, 0.5
    %v550 = vmul.f32 %v542, 0.5
    %v551 = vmul.f32 %v543, 0.5
    %v552 = vmul.f32 %v544, 0.5
    %v553 = vmul.f32 %v545, 0.5
    %v554 = vmul.f32 %v546, 0.5
    %v555 = vmul.f32 %v547, 0.5
    %v556 = vmul.f32 %v548, %v548
    %v557 = vmul.f32 %v549, %v549
    %v558 = vmul.f32 %v550, %v550
    %v559 = vmul.f32 %v551, %v551
    %v560 = vmul.f32 %v552, %v552
    %v561 = vmul.f32 %v553, %v553
    %v562 = vmul.f32 %v554, %v554
    %v563 = vmul.f32 %v555, %v555
    %v564 = vsub.f32 1.0, %v556
    %v565 = vsub.f32 1.0, %v557
    %v566 = vsub.f32 1.0, %v558
    %v567 = vsub.f32 1.0, %v559
    %v568 = vsub.f32 1.0, %v560
    %v569 = vsub.f32 1.0, %v561
    %v570 = vsub.f32 1.0, %v562
    %v571 = vsub.f32 1.0, %v563
    %v572 = vadd.f32 %v564, 1e-08
    %v573 = vadd.f32 %v565, 1e-08
    %v574 = vadd.f32 %v566, 1e-08
    %v575 = vadd.f32 %v567, 1e-08
    %v576 = vadd.f32 %v568, 1e-08
    %v577 = vadd.f32 %v569, 1e-08
    %v578 = vadd.f32 %v570, 1e-08
    %v579 = vadd.f32 %v571, 1e-08
    %v580 = vrsqrt.pop %v572
    %v581 = vmul.f32 %v580, %v572
    %v582 = vmul.f32 %v581, %v580
    %v583 = vmul.f32 0.5, %v582
    %v584 = vsub.f32 1.5, %v583
    %v585 = vmul.f32 %v580, %v584
    %v586 = vmul.f32 %v572, %v585
    %vm587 = vcmp.eq.f32.partialorder %v572, inf
    %v588 = vsel %vm587, %v572, %v586
    %vm589 = vcmp.eq.f32.partialorder %v572, 0.0
    %v590 = vand.u32 %v572, 2147483648
    %v591 = vsel %vm589, %v590, %v588
    %v592 = vrsqrt.pop %v573
    %v593 = vmul.f32 %v592, %v573
    %v594 = vmul.f32 %v593, %v592
    %v595 = vmul.f32 0.5, %v594
    %v596 = vsub.f32 1.5, %v595
    %v597 = vmul.f32 %v592, %v596
    %v598 = vmul.f32 %v573, %v597
    %vm599 = vcmp.eq.f32.partialorder %v573, inf
    %v600 = vsel %vm599, %v573, %v598
    %vm601 = vcmp.eq.f32.partialorder %v573, 0.0
    %v602 = vand.u32 %v573, 2147483648
    %v603 = vsel %vm601, %v602, %v600
    %v604 = vrsqrt.pop %v574
    %v605 = vmul.f32 %v604, %v574
    %v606 = vmul.f32 %v605, %v604
    %v607 = vmul.f32 0.5, %v606
    %v608 = vsub.f32 1.5, %v607
    %v609 = vmul.f32 %v604, %v608
    %v610 = vmul.f32 %v574, %v609
    %vm611 = vcmp.eq.f32.partialorder %v574, inf
    %v612 = vsel %vm611, %v574, %v610
    %vm613 = vcmp.eq.f32.partialorder %v574, 0.0
    %v614 = vand.u32 %v574, 2147483648
    %v615 = vsel %vm613, %v614, %v612
    %v616 = vrsqrt.pop %v575
    %v617 = vmul.f32 %v616, %v575
    %v618 = vmul.f32 %v617, %v616
    %v619 = vmul.f32 0.5, %v618
    %v620 = vsub.f32 1.5, %v619
    %v621 = vmul.f32 %v616, %v620
    %v622 = vmul.f32 %v575, %v621
    %vm623 = vcmp.eq.f32.partialorder %v575, inf
    %v624 = vsel %vm623, %v575, %v622
    %vm625 = vcmp.eq.f32.partialorder %v575, 0.0
    %v626 = vand.u32 %v575, 2147483648
    %v627 = vsel %vm625, %v626, %v624
    %v628 = vrsqrt.pop %v576
    %v629 = vmul.f32 %v628, %v576
    %v630 = vmul.f32 %v629, %v628
    %v631 = vmul.f32 0.5, %v630
    %v632 = vsub.f32 1.5, %v631
    %v633 = vmul.f32 %v628, %v632
    %v634 = vmul.f32 %v576, %v633
    %vm635 = vcmp.eq.f32.partialorder %v576, inf
    %v636 = vsel %vm635, %v576, %v634
    %vm637 = vcmp.eq.f32.partialorder %v576, 0.0
    %v638 = vand.u32 %v576, 2147483648
    %v639 = vsel %vm637, %v638, %v636
    %v640 = vrsqrt.pop %v577
    %v641 = vmul.f32 %v640, %v577
    %v642 = vmul.f32 %v641, %v640
    %v643 = vmul.f32 0.5, %v642
    %v644 = vsub.f32 1.5, %v643
    %v645 = vmul.f32 %v640, %v644
    %v646 = vmul.f32 %v577, %v645
    %vm647 = vcmp.eq.f32.partialorder %v577, inf
    %v648 = vsel %vm647, %v577, %v646
    %vm649 = vcmp.eq.f32.partialorder %v577, 0.0
    %v650 = vand.u32 %v577, 2147483648
    %v651 = vsel %vm649, %v650, %v648
    %v652 = vrsqrt.pop %v578
    %v653 = vmul.f32 %v652, %v578
    %v654 = vmul.f32 %v653, %v652
    %v655 = vmul.f32 0.5, %v654
    %v656 = vsub.f32 1.5, %v655
    %v657 = vmul.f32 %v652, %v656
    %v658 = vmul.f32 %v578, %v657
    %vm659 = vcmp.eq.f32.partialorder %v578, inf
    %v660 = vsel %vm659, %v578, %v658
    %vm661 = vcmp.eq.f32.partialorder %v578, 0.0
    %v662 = vand.u32 %v578, 2147483648
    %v663 = vsel %vm661, %v662, %v660
    %v664 = vrsqrt.pop %v579
    %v665 = vmul.f32 %v664, %v579
    %v666 = vmul.f32 %v665, %v664
    %v667 = vmul.f32 0.5, %v666
    %v668 = vsub.f32 1.5, %v667
    %v669 = vmul.f32 %v664, %v668
    %v670 = vmul.f32 %v579, %v669
    %vm671 = vcmp.eq.f32.partialorder %v579, inf
    %v672 = vsel %vm671, %v579, %v670
    %vm673 = vcmp.eq.f32.partialorder %v579, 0.0
    %v674 = vand.u32 %v579, 2147483648
    %v675 = vsel %vm673, %v674, %v672
    %v676 = vmul.f32 %v548, %v523
    %v677 = vmul.f32 %v549, %v524
    %v678 = vmul.f32 %v550, %v525
    %v679 = vmul.f32 %v551, %v526
    %v680 = vmul.f32 %v552, %v527
    %v681 = vmul.f32 %v553, %v528
    %v682 = vmul.f32 %v554, %v529
    %v683 = vmul.f32 %v555, %v530
    %v684 = vadd.f32 %v676, 1.0
    %v685 = vadd.f32 %v677, 1.0
    %v686 = vadd.f32 %v678, 1.0
    %v687 = vadd.f32 %v679, 1.0
    %v688 = vadd.f32 %v680, 1.0
    %v689 = vadd.f32 %v681, 1.0
    %v690 = vadd.f32 %v682, 1.0
    %v691 = vadd.f32 %v683, 1.0
    %v692 = vrcp.pop %v684
    %v693 = vmul.f32 %v684, %v692
    %v694 = vsub.f32 1.0, %v693
    %v695 = vmul.f32 %v692, %v694
    %v696 = vadd.f32 %v692, %v695
    %vm697 = vweird.f32 %v684
    %vm698 = vweird.f32 %v692
    %vm699 = vmor %vm697, %vm698
    %v700 = vsel %vm699, %v692, %v696
    %v701 = vand.u32 2147483647, %v684
    %vm702 = vcmp.eq.f32.partialorder %v701, 8.507059e+37
    %v703 = vand.u32 %v684, 2147483648
    %v704 = vor.u32 1.1754944e-38, %v703
    %v705 = vsel %vm702, %v704, %v700
    %v706 = vmul.f32 %v591, %v705
    %v707 = vrcp.pop %v685
    %v708 = vmul.f32 %v685, %v707
    %v709 = vsub.f32 1.0, %v708
    %v710 = vmul.f32 %v707, %v709
    %v711 = vadd.f32 %v707, %v710
    %vm712 = vweird.f32 %v685
    %vm713 = vweird.f32 %v707
    %vm714 = vmor %vm712, %vm713
    %v715 = vsel %vm714, %v707, %v711
    %v716 = vand.u32 2147483647, %v685
    %vm717 = vcmp.eq.f32.partialorder %v716, 8.507059e+37
    %v718 = vand.u32 %v685, 2147483648
    %v719 = vor.u32 1.1754944e-38, %v718
    %v720 = vsel %vm717, %v719, %v715
    %v721 = vmul.f32 %v603, %v720
    %v722 = vrcp.pop %v686
    %v723 = vmul.f32 %v686, %v722
    %v724 = vsub.f32 1.0, %v723
    %v725 = vmul.f32 %v722, %v724
    %v726 = vadd.f32 %v722, %v725
    %vm727 = vweird.f32 %v686
    %vm728 = vweird.f32 %v722
    %vm729 = vmor %vm727, %vm728
    %v730 = vsel %vm729, %v722, %v726
    %v731 = vand.u32 2147483647, %v686
    %vm732 = vcmp.eq.f32.partialorder %v731, 8.507059e+37
    %v733 = vand.u32 %v686, 2147483648
    %v734 = vor.u32 1.1754944e-38, %v733
    %v735 = vsel %vm732, %v734, %v730
    %v736 = vmul.f32 %v615, %v735
    %v737 = vrcp.pop %v687
    %v738 = vmul.f32 %v687, %v737
    %v739 = vsub.f32 1.0, %v738
    %v740 = vmul.f32 %v737, %v739
    %v741 = vadd.f32 %v737, %v740
    %vm742 = vweird.f32 %v687
    %vm743 = vweird.f32 %v737
    %vm744 = vmor %vm742, %vm743
    %v745 = vsel %vm744, %v737, %v741
    %v746 = vand.u32 2147483647, %v687
    %vm747 = vcmp.eq.f32.partialorder %v746, 8.507059e+37
    %v748 = vand.u32 %v687, 2147483648
    %v749 = vor.u32 1.1754944e-38, %v748
    %v750 = vsel %vm747, %v749, %v745
    %v751 = vmul.f32 %v627, %v750
    %v752 = vrcp.pop %v688
    %v753 = vmul.f32 %v688, %v752
    %v754 = vsub.f32 1.0, %v753
    %v755 = vmul.f32 %v752, %v754
    %v756 = vadd.f32 %v752, %v755
    %vm757 = vweird.f32 %v688
    %vm758 = vweird.f32 %v752
    %vm759 = vmor %vm757, %vm758
    %v760 = vsel %vm759, %v752, %v756
    %v761 = vand.u32 2147483647, %v688
    %vm762 = vcmp.eq.f32.partialorder %v761, 8.507059e+37
    %v763 = vand.u32 %v688, 2147483648
    %v764 = vor.u32 1.1754944e-38, %v763
    %v765 = vsel %vm762, %v764, %v760
    %v766 = vmul.f32 %v639, %v765
    %v767 = vrcp.pop %v689
    %v768 = vmul.f32 %v689, %v767
    %v769 = vsub.f32 1.0, %v768
    %v770 = vmul.f32 %v767, %v769
    %v771 = vadd.f32 %v767, %v770
    %vm772 = vweird.f32 %v689
    %vm773 = vweird.f32 %v767
    %vm774 = vmor %vm772, %vm773
    %v775 = vsel %vm774, %v767, %v771
    %v776 = vand.u32 2147483647, %v689
    %vm777 = vcmp.eq.f32.partialorder %v776, 8.507059e+37
    %v778 = vand.u32 %v689, 2147483648
    %v779 = vor.u32 1.1754944e-38, %v778
    %v780 = vsel %vm777, %v779, %v775
    %v781 = vmul.f32 %v651, %v780
    %v782 = vrcp.pop %v690
    %v783 = vmul.f32 %v690, %v782
    %v784 = vsub.f32 1.0, %v783
    %v785 = vmul.f32 %v782, %v784
    %v786 = vadd.f32 %v782, %v785
    %vm787 = vweird.f32 %v690
    %vm788 = vweird.f32 %v782
    %vm789 = vmor %vm787, %vm788
    %v790 = vsel %vm789, %v782, %v786
    %v791 = vand.u32 2147483647, %v690
    %vm792 = vcmp.eq.f32.partialorder %v791, 8.507059e+37
    %v793 = vand.u32 %v690, 2147483648
    %v794 = vor.u32 1.1754944e-38, %v793
    %v795 = vsel %vm792, %v794, %v790
    %v796 = vmul.f32 %v663, %v795
    %v797 = vrcp.pop %v691
    %v798 = vmul.f32 %v691, %v797
    %v799 = vsub.f32 1.0, %v798
    %v800 = vmul.f32 %v797, %v799
    %v801 = vadd.f32 %v797, %v800
    %vm802 = vweird.f32 %v691
    %vm803 = vweird.f32 %v797
    %vm804 = vmor %vm802, %vm803
    %v805 = vsel %vm804, %v797, %v801
    %v806 = vand.u32 2147483647, %v691
    %vm807 = vcmp.eq.f32.partialorder %v806, 8.507059e+37
    %v808 = vand.u32 %v691, 2147483648
    %v809 = vor.u32 1.1754944e-38, %v808
    %v810 = vsel %vm807, %v809, %v805
    %v811 = vmul.f32 %v675, %v810
    %v812 = vpack.c.bf16 %v279, %v276
    %v813 = vpack.c.bf16 %v285, %v282
    %v814 = vpack.c.bf16 %v291, %v288
    %v815 = vpack.c.bf16 %v297, %v294
    %v816 = vperm.slane %v83, 0
    %v818 = vsel %vm209, %v812, 0
    %v821 = vsel %vm209, %v813, 0
    %v824 = vsel %vm209, %v814, 0
    %v827 = vsel %vm209, %v815, 0
    %829 = vmatpush.bf16.msra.mxu0 0
    %830 = vmatpush.bf16.msra.mxu0 0
    %831 = vmatpush.bf16.msra.mxu0 0
    %832 = vmatpush.bf16.msra.mxu0 0
    %833 = vmatpush.bf16.msra.mxu0 0
    %834 = vmatpush.bf16.msra.mxu0 0
    %835 = vmatpush.bf16.msra.mxu0 %v41
    %836 = vmatpush.bf16.msra.mxu0 %v40
    %837 = vmatmul.bf16.gmra.mxu0 %v818
    %v838 = vpop.f32.mrf.mxu0
    %v839 = vadd.f32 %v816, %v838
    %v840 = vpop.f32.mrf.mxu0
    %v841 = vadd.f32 %v816, %v840
    %842 = vmatmul.bf16.gmra.mxu0 %v821
    %v843 = vpop.f32.mrf.mxu0
    %v844 = vadd.f32 %v816, %v843
    %v845 = vpop.f32.mrf.mxu0
    %v846 = vadd.f32 %v816, %v845
    %847 = vmatmul.bf16.gmra.mxu0 %v824
    %v848 = vpop.f32.mrf.mxu0
    %v849 = vadd.f32 %v816, %v848
    %v850 = vpop.f32.mrf.mxu0
    %v851 = vadd.f32 %v816, %v850
    %852 = vmatmul.bf16.gmra.mxu0 %v827
    %v853 = vpop.f32.mrf.mxu0
    %v854 = vadd.f32 %v816, %v853
    %v855 = vpop.f32.mrf.mxu0
    %v856 = vadd.f32 %v816, %v855
    %857 = vdwg.mxu0
    %v858 = vmul.f32 %v839, %v706
    %v859 = vmul.f32 %v841, %v721
    %v860 = vmul.f32 %v844, %v736
    %v861 = vmul.f32 %v846, %v751
    %v862 = vmul.f32 %v849, %v766
    %v863 = vmul.f32 %v851, %v781
    %v864 = vmul.f32 %v854, %v796
    %v865 = vmul.f32 %v856, %v811
    %v866 = vpack.c.bf16 %v859, %v858
    %v867 = vpack.c.bf16 %v861, %v860
    %v868 = vpack.c.bf16 %v863, %v862
    %v869 = vpack.c.bf16 %v865, %v864
    %vm870 = vcmask 523264
    %v872 = vsel %vm870, %v175, 0
    %v875 = vsel %vm870, %v176, 0
    %877 = vmatpush.bf16.msra.mxu0 0
    %878 = vmatpush.bf16.msra.mxu0 0
    %879 = vmatpush.bf16.msra.mxu0 0
    %880 = vmatpush.bf16.msra.mxu0 0
    %881 = vmatpush.bf16.msra.mxu0 %v869
    %882 = vmatpush.bf16.msra.mxu0 %v868
    %883 = vmatpush.bf16.msra.mxu0 %v867
    %884 = vmatpush.bf16.msra.mxu0 %v866
    %885 = vmatmul.bf16.gmra.mxu0 %v872
    %v886 = vpop.f32.mrf.mxu0
    %v887 = vadd.f32 0.0, %v886
    %v888 = vpop.f32.mrf.mxu0
    %v889 = vadd.f32 0.0, %v888
    %890 = vmatmul.bf16.gmra.mxu0 %v875
    %v891 = vpop.f32.mrf.mxu0
    %v892 = vadd.f32 0.0, %v891
    %v893 = vpop.f32.mrf.mxu0
    %v894 = vadd.f32 0.0, %v893
    %895 = vdwg.mxu0
    %v897 = vsel %vm209, 0.03125, 0
    %899 = vmatpush.msra.mxu0 0.0
    %900 = vmatpush.msra.mxu0 0.0
    %901 = vmatpush.msra.mxu0 0.0
    %902 = vmatpush.msra.mxu0 0.0
    %903 = vmatpush.msra.mxu0 0.0
    %904 = vmatpush.msra.mxu0 0.0
    %905 = vmatpush.msra.mxu0 0.0
    %906 = vmatpush.msra.mxu0 0.0
    %907 = vmatpush.msra.mxu0 0.0
    %908 = vmatpush.msra.mxu0 0.0
    %909 = vmatpush.msra.mxu0 0.0
    %910 = vmatpush.msra.mxu0 0.0
    %911 = vmatpush.msra.mxu0 %v894
    %912 = vmatpush.msra.mxu0 %v892
    %913 = vmatpush.msra.mxu0 %v889
    %914 = vmatpush.msra.mxu0 %v887
    %915 = vmatmul.f32.gmra.mxu0 %v897
    %v916 = vpop.f32.mrf.mxu0
    %v917 = vadd.f32 0.0, %v916
    %918 = vmatmul.f32.gmra.mxu0 %v897
    %v919 = vpop.f32.mrf.mxu0
    %v920 = vadd.f32 0.0, %v919
    %921 = vmatmul.f32.gmra.mxu0 %v897
    %v922 = vpop.f32.mrf.mxu0
    %v923 = vadd.f32 0.0, %v922
    %924 = vmatmul.f32.gmra.mxu0 %v897
    %v925 = vpop.f32.mrf.mxu0
    %v926 = vadd.f32 0.0, %v925
    %927 = vdwg.mxu0
    %v928 = vsub.f32 %v887, %v917
    %v929 = vsub.f32 %v889, %v920
    %v930 = vsub.f32 %v892, %v923
    %v931 = vsub.f32 %v894, %v926
    %v932 = vmul.f32 %v928, %v928
    %v933 = vmul.f32 %v929, %v929
    %v934 = vmul.f32 %v930, %v930
    %v935 = vmul.f32 %v931, %v931
    %936 = vmatpush.msra.mxu0 0.0
    %937 = vmatpush.msra.mxu0 0.0
    %938 = vmatpush.msra.mxu0 0.0
    %939 = vmatpush.msra.mxu0 0.0
    %940 = vmatpush.msra.mxu0 0.0
    %941 = vmatpush.msra.mxu0 0.0
    %942 = vmatpush.msra.mxu0 0.0
    %943 = vmatpush.msra.mxu0 0.0
    %944 = vmatpush.msra.mxu0 0.0
    %945 = vmatpush.msra.mxu0 0.0
    %946 = vmatpush.msra.mxu0 0.0
    %947 = vmatpush.msra.mxu0 0.0
    %948 = vmatpush.msra.mxu0 %v935
    %949 = vmatpush.msra.mxu0 %v934
    %950 = vmatpush.msra.mxu0 %v933
    %951 = vmatpush.msra.mxu0 %v932
    %952 = vmatmul.f32.gmra.mxu0 %v897
    %v953 = vpop.f32.mrf.mxu0
    %v954 = vadd.f32 1e-05, %v953
    %955 = vmatmul.f32.gmra.mxu0 %v897
    %v956 = vpop.f32.mrf.mxu0
    %v957 = vadd.f32 1e-05, %v956
    %958 = vmatmul.f32.gmra.mxu0 %v897
    %v959 = vpop.f32.mrf.mxu0
    %v960 = vadd.f32 1e-05, %v959
    %961 = vmatmul.f32.gmra.mxu0 %v897
    %v962 = vpop.f32.mrf.mxu0
    %v963 = vadd.f32 1e-05, %v962
    %964 = vdwg.mxu0
    %v965 = vrsqrt.pop %v954
    %v966 = vmul.f32 %v965, %v954
    %v967 = vmul.f32 %v966, %v965
    %v968 = vmul.f32 0.5, %v967
    %v969 = vsub.f32 1.5, %v968
    %v970 = vmul.f32 %v965, %v969
    %vm971 = vweird.f32 %v954
    %vm972 = vweird.f32 %v965
    %vm973 = vmor %vm971, %vm972
    %v974 = vsel %vm973, %v965, %v970
    %v975 = vrsqrt.pop %v957
    %v976 = vmul.f32 %v975, %v957
    %v977 = vmul.f32 %v976, %v975
    %v978 = vmul.f32 0.5, %v977
    %v979 = vsub.f32 1.5, %v978
    %v980 = vmul.f32 %v975, %v979
    %vm981 = vweird.f32 %v957
    %vm982 = vweird.f32 %v975
    %vm983 = vmor %vm981, %vm982
    %v984 = vsel %vm983, %v975, %v980
    %v985 = vrsqrt.pop %v960
    %v986 = vmul.f32 %v985, %v960
    %v987 = vmul.f32 %v986, %v985
    %v988 = vmul.f32 0.5, %v987
    %v989 = vsub.f32 1.5, %v988
    %v990 = vmul.f32 %v985, %v989
    %vm991 = vweird.f32 %v960
    %vm992 = vweird.f32 %v985
    %vm993 = vmor %vm991, %vm992
    %v994 = vsel %vm993, %v985, %v990
    %v995 = vrsqrt.pop %v963
    %v996 = vmul.f32 %v995, %v963
    %v997 = vmul.f32 %v996, %v995
    %v998 = vmul.f32 0.5, %v997
    %v999 = vsub.f32 1.5, %v998
    %v1000 = vmul.f32 %v995, %v999
    %vm1001 = vweird.f32 %v963
    %vm1002 = vweird.f32 %v995
    %vm1003 = vmor %vm1001, %vm1002
    %v1004 = vsel %vm1003, %v995, %v1000
    %v1005 = vmul.f32 %v928, %v974
    %v1006 = vmul.f32 %v929, %v984
    %v1007 = vmul.f32 %v930, %v994
    %v1008 = vmul.f32 %v931, %v1004
    %v1009 = vperm.slane %v84, 0
    %v1010 = vmul.f32 %v1005, %v1009
    %v1011 = vmul.f32 %v1006, %v1009
    %v1012 = vmul.f32 %v1007, %v1009
    %v1013 = vmul.f32 %v1008, %v1009
    %v1014 = vperm.slane %v85, 0
    %v1015 = vadd.f32 %v1010, %v1014
    %v1016 = vadd.f32 %v1011, %v1014
    %v1017 = vadd.f32 %v1012, %v1014
    %v1018 = vadd.f32 %v1013, %v1014
    %v1019 = vmax.f32 %v1015, 0.0
    %v1020 = vmax.f32 %v1016, 0.0
    %v1021 = vmax.f32 %v1017, 0.0
    %v1022 = vmax.f32 %v1018, 0.0
    %v1023 = vpack.c.bf16 %v1020, %v1019
    %v1024 = vpack.c.bf16 %v1022, %v1021
    %v1025 = vperm.slane %v86, 0
    %1026 = vmatpush.bf16.msra.mxu0 %v65
    %1027 = vmatpush.bf16.msra.mxu0 %v64
    %1028 = vmatpush.bf16.msra.mxu0 %v63
    %1029 = vmatpush.bf16.msra.mxu0 %v62
    %1030 = vmatpush.bf16.msra.mxu0 %v61
    %1031 = vmatpush.bf16.msra.mxu0 %v60
    %1032 = vmatpush.bf16.msra.mxu0 %v59
    %1033 = vmatpush.bf16.msra.mxu0 %v58
    %1034 = vmatmul.bf16.gmra.mxu0 %v1023
    %v1035 = vpop.f32.mrf.mxu0
    %v1036 = vadd.f32 %v1025, %v1035
    %v1037 = vpop.f32.mrf.mxu0
    %v1038 = vadd.f32 %v1025, %v1037
    %1039 = vmatmul.bf16.gmra.mxu0 %v1024
    %v1040 = vpop.f32.mrf.mxu0
    %v1041 = vadd.f32 %v1025, %v1040
    %v1042 = vpop.f32.mrf.mxu0
    %v1043 = vadd.f32 %v1025, %v1042
    %1044 = vdwg.mxu0
    %1045 = vmatpush.msra.mxu0 0.015625
    %1046 = vmatpush.msra.mxu0 0.015625
    %1047 = vmatpush.msra.mxu0 0.015625
    %1048 = vmatpush.msra.mxu0 0.015625
    %1049 = vmatpush.msra.mxu0 0.015625
    %1050 = vmatpush.msra.mxu0 0.015625
    %1051 = vmatpush.msra.mxu0 0.015625
    %1052 = vmatpush.msra.mxu0 0.015625
    %1053 = vmatpush.msra.mxu0 0.015625
    %1054 = vmatpush.msra.mxu0 0.015625
    %1055 = vmatpush.msra.mxu0 0.015625
    %1056 = vmatpush.msra.mxu0 0.015625
    %1057 = vmatpush.msra.mxu0 0.015625
    %1058 = vmatpush.msra.mxu0 0.015625
    %1059 = vmatpush.msra.mxu0 0.015625
    %1060 = vmatpush.msra.mxu0 0.015625
    %1061 = vmatmul.f32.gmra.mxu0 %v1036
    %v1062 = vpop.f32.mrf.mxu0
    %v1063 = vadd.f32 0.0, %v1062
    %1064 = vmatmul.f32.gmra.mxu0 %v1038
    %v1065 = vpop.f32.mrf.mxu0
    %v1066 = vadd.f32 0.0, %v1065
    %1067 = vmatmul.f32.gmra.mxu0 %v1041
    %v1068 = vpop.f32.mrf.mxu0
    %v1069 = vadd.f32 0.0, %v1068
    %1070 = vmatmul.f32.gmra.mxu0 %v1043
    %v1071 = vpop.f32.mrf.mxu0
    %v1072 = vadd.f32 0.0, %v1071
    %1073 = vdwg.mxu0
    %v1074 = vmul.f32 %v1036, %v1036
    %v1075 = vmul.f32 %v1038, %v1038
    %v1076 = vmul.f32 %v1041, %v1041
    %v1077 = vmul.f32 %v1043, %v1043
    %1078 = vmatpush.msra.mxu0 0.015625
    %1079 = vmatpush.msra.mxu0 0.015625
    %1080 = vmatpush.msra.mxu0 0.015625
    %1081 = vmatpush.msra.mxu0 0.015625
    %1082 = vmatpush.msra.mxu0 0.015625
    %1083 = vmatpush.msra.mxu0 0.015625
    %1084 = vmatpush.msra.mxu0 0.015625
    %1085 = vmatpush.msra.mxu0 0.015625
    %1086 = vmatpush.msra.mxu0 0.015625
    %1087 = vmatpush.msra.mxu0 0.015625
    %1088 = vmatpush.msra.mxu0 0.015625
    %1089 = vmatpush.msra.mxu0 0.015625
    %1090 = vmatpush.msra.mxu0 0.015625
    %1091 = vmatpush.msra.mxu0 0.015625
    %1092 = vmatpush.msra.mxu0 0.015625
    %1093 = vmatpush.msra.mxu0 0.015625
    %1094 = vmatmul.f32.gmra.mxu0 %v1074
    %v1095 = vpop.f32.mrf.mxu0
    %v1096 = vadd.f32 0.0, %v1095
    %1097 = vmatmul.f32.gmra.mxu0 %v1075
    %v1098 = vpop.f32.mrf.mxu0
    %v1099 = vadd.f32 0.0, %v1098
    %1100 = vmatmul.f32.gmra.mxu0 %v1076
    %v1101 = vpop.f32.mrf.mxu0
    %v1102 = vadd.f32 0.0, %v1101
    %1103 = vmatmul.f32.gmra.mxu0 %v1077
    %v1104 = vpop.f32.mrf.mxu0
    %v1105 = vadd.f32 0.0, %v1104
    %1106 = vdwg.mxu0
    %v1107 = vsub.f32 %v1036, %v1063
    %v1108 = vsub.f32 %v1038, %v1066
    %v1109 = vsub.f32 %v1041, %v1069
    %v1110 = vsub.f32 %v1043, %v1072
    %v1111 = vmul.f32 %v1063, %v1063
    %v1112 = vmul.f32 %v1066, %v1066
    %v1113 = vmul.f32 %v1069, %v1069
    %v1114 = vmul.f32 %v1072, %v1072
    %v1115 = vsub.f32 %v1096, %v1111
    %v1116 = vsub.f32 %v1099, %v1112
    %v1117 = vsub.f32 %v1102, %v1113
    %v1118 = vsub.f32 %v1105, %v1114
    %v1119 = vadd.f32 %v1115, 1e-05
    %v1120 = vadd.f32 %v1116, 1e-05
    %v1121 = vadd.f32 %v1117, 1e-05
    %v1122 = vadd.f32 %v1118, 1e-05
    %v1123 = vrsqrt.pop %v1119
    %v1124 = vmul.f32 %v1123, %v1119
    %v1125 = vmul.f32 %v1124, %v1123
    %v1126 = vmul.f32 0.5, %v1125
    %v1127 = vsub.f32 1.5, %v1126
    %v1128 = vmul.f32 %v1123, %v1127
    %vm1129 = vweird.f32 %v1119
    %vm1130 = vweird.f32 %v1123
    %vm1131 = vmor %vm1129, %vm1130
    %v1132 = vsel %vm1131, %v1123, %v1128
    %v1133 = vrsqrt.pop %v1120
    %v1134 = vmul.f32 %v1133, %v1120
    %v1135 = vmul.f32 %v1134, %v1133
    %v1136 = vmul.f32 0.5, %v1135
    %v1137 = vsub.f32 1.5, %v1136
    %v1138 = vmul.f32 %v1133, %v1137
    %vm1139 = vweird.f32 %v1120
    %vm1140 = vweird.f32 %v1133
    %vm1141 = vmor %vm1139, %vm1140
    %v1142 = vsel %vm1141, %v1133, %v1138
    %v1143 = vrsqrt.pop %v1121
    %v1144 = vmul.f32 %v1143, %v1121
    %v1145 = vmul.f32 %v1144, %v1143
    %v1146 = vmul.f32 0.5, %v1145
    %v1147 = vsub.f32 1.5, %v1146
    %v1148 = vmul.f32 %v1143, %v1147
    %vm1149 = vweird.f32 %v1121
    %vm1150 = vweird.f32 %v1143
    %vm1151 = vmor %vm1149, %vm1150
    %v1152 = vsel %vm1151, %v1143, %v1148
    %v1153 = vrsqrt.pop %v1122
    %v1154 = vmul.f32 %v1153, %v1122
    %v1155 = vmul.f32 %v1154, %v1153
    %v1156 = vmul.f32 0.5, %v1155
    %v1157 = vsub.f32 1.5, %v1156
    %v1158 = vmul.f32 %v1153, %v1157
    %vm1159 = vweird.f32 %v1122
    %vm1160 = vweird.f32 %v1153
    %vm1161 = vmor %vm1159, %vm1160
    %v1162 = vsel %vm1161, %v1153, %v1158
    %v1163 = vmul.f32 %v1107, %v1132
    %v1164 = vmul.f32 %v1108, %v1142
    %v1165 = vmul.f32 %v1109, %v1152
    %v1166 = vmul.f32 %v1110, %v1162
    %v1167 = vperm.slane %v87, 0
    %v1168 = vmul.f32 %v1163, %v1167
    %v1169 = vmul.f32 %v1164, %v1167
    %v1170 = vmul.f32 %v1165, %v1167
    %v1171 = vmul.f32 %v1166, %v1167
    %v1172 = vperm.slane %v88, 0
    %v1173 = vadd.f32 %v1168, %v1172
    %v1174 = vadd.f32 %v1169, %v1172
    %v1175 = vadd.f32 %v1170, %v1172
    %v1176 = vadd.f32 %v1171, %v1172
    %v1177 = vmax.f32 %v1173, 0.0
    %v1178 = vmax.f32 %v1174, 0.0
    %v1179 = vmax.f32 %v1175, 0.0
    %v1180 = vmax.f32 %v1176, 0.0
    %v1181 = vperm.slane %v89, 0
    %1182 = vmatpush.msra.mxu0 %v81
    %1183 = vmatpush.msra.mxu0 %v80
    %1184 = vmatpush.msra.mxu0 %v79
    %1185 = vmatpush.msra.mxu0 %v78
    %1186 = vmatpush.msra.mxu0 %v77
    %1187 = vmatpush.msra.mxu0 %v76
    %1188 = vmatpush.msra.mxu0 %v75
    %1189 = vmatpush.msra.mxu0 %v74
    %1190 = vmatpush.msra.mxu0 %v73
    %1191 = vmatpush.msra.mxu0 %v72
    %1192 = vmatpush.msra.mxu0 %v71
    %1193 = vmatpush.msra.mxu0 %v70
    %1194 = vmatpush.msra.mxu0 %v69
    %1195 = vmatpush.msra.mxu0 %v68
    %1196 = vmatpush.msra.mxu0 %v67
    %1197 = vmatpush.msra.mxu0 %v66
    %1198 = vmatmul.f32.gmra.mxu0 %v1177
    %v1199 = vpop.f32.mrf.mxu0
    %v1200 = vadd.f32 %v1181, %v1199
    %1201 = vmatmul.f32.gmra.mxu0 %v1178
    %v1202 = vpop.f32.mrf.mxu0
    %v1203 = vadd.f32 %v1181, %v1202
    %1204 = vmatmul.f32.gmra.mxu0 %v1179
    %v1205 = vpop.f32.mrf.mxu0
    %v1206 = vadd.f32 %v1181, %v1205
    %1207 = vmatmul.f32.gmra.mxu0 %v1180
    %v1208 = vpop.f32.mrf.mxu0
    %v1209 = vadd.f32 %v1181, %v1208
    %1210 = vdwg.mxu0
    %1211 = vst [vmem:[%s4] sm:$0xff] %v1200
    %1212 = vst [vmem:[%s4 + $0x8] sm:$0xff] %v1203
    %1213 = vst [vmem:[%s4 + $0x10] sm:$0xff] %v1206
    %1214 = vst [vmem:[%s4 + $0x18] sm:$0xff] %v1209
    // Predicated region
    $region22: #{multi_observer_gnn.1} parent=1 // pred_check
      _
    $region23: #{multi_observer_gnn.1} parent=1 // pred_check_branch
      %1216 = sbr.rel (0) target = $region25
    $region24: #{multi_observer_gnn.1} parent=1 // pred_region
      _
    $region25: #{multi_observer_gnn.1} parent=1 // pred_fallthru
      _
    // Predicated region
    $region26: #{multi_observer_gnn.1} parent=1 // pred_check
      _
    $region27: #{multi_observer_gnn.1} parent=1 // pred_check_branch
      %1218 = sbr.rel (0) target = $region29
    $region28: #{multi_observer_gnn.1} parent=1 // pred_region
      _
    $region29: #{multi_observer_gnn.1} parent=1 // pred_fallthru
      _
    %1219 = vsyncpa [#allocation3], 1

</llo_original>
